<compile_context>
chip_gen: v5e
topology: v5e:2x2
jax: 0.10.0
libtpu: 0.0.40
codegen_flags: <defaults>
</compile_context>

<pallas_src>
import functools
from collections import namedtuple

import jax
import jax.numpy as jnp
from jax import lax
from jax.experimental import pallas as pl
from jax.experimental.pallas import tpu as pltpu


def _round_up(x, m):
    return (x + m - 1) // m * m


def _vmem_budget_bytes():
    """Generation-aware scoped-VMEM budget (~3/4 of physical capacity)."""
    cap = 64 * 1024 * 1024  # conservative fallback (v7x per-TC VMEM)
    try:
        info = pltpu.get_tpu_info()
        cap = int(getattr(info, "vmem_capacity_bytes", cap)) or cap
    except Exception:
        pass
    # ~96 MiB on v5e/v6e (128 MiB physical), ~48 MiB on v7x (64 MiB).
    return (cap * 3) // 4


_Plan = namedtuple(
    "_Plan", "ab cd ab_pad cd_pad tk row_pad col_pad num_k vmem_limit")


def _plan(shape, in_dtype, mxu_dtype):
    """Pick tiling so the kernel reads the feature matrix in place."""
    a, b, c, d = shape
    ab, cd = a * b, c * d
    ab_pad = _round_up(max(ab, 1), 128)       # lane-dense gram/accumulator
    row_pad = ab_pad != ab
    in_bytes = jnp.dtype(in_dtype).itemsize
    mxu_bytes = jnp.dtype(mxu_dtype).itemsize

    vmem_limit = _vmem_budget_bytes()
    # Fixed VMEM residents: f32 accumulator + (double-buffered) target/gram
    # block + slack for compiler-internal scratch.
    fixed = 3 * ab_pad * ab_pad * 4 + (2 << 20)
    # Per-contraction-column cost: double-buffered feature tile (+ row-padded
    # MXU staging scratch when needed).
    per_col = 2 * ab * in_bytes + (ab_pad * mxu_bytes if row_pad else 0)
    avail = max((vmem_limit * 4) // 5 - fixed, 128 * per_col)
    max_tk = max(128, (avail // per_col) // 128 * 128)

    if cd % 128 == 0:
        # Largest lane-aligned divisor of cd that fits the budget: no column
        # padding, no wrapper-side copy of the feature matrix.
        q = cd // 128
        tk = 128
        for div in range(min(q, max_tk // 128), 0, -1):
            if q % div == 0:
                tk = 128 * div
                break
        cd_pad, col_pad = cd, False
    elif cd <= max_tk:
        # Ragged but small enough: a single full-extent block, still no copy.
        tk, cd_pad, col_pad = cd, cd, False
    else:
        # Ragged and large: pad once (single fused copy) so TK can stay big.
        tk = max(128, min(max_tk, _round_up(cd, 128)))
        cd_pad, col_pad = _round_up(cd, tk), True

    return _Plan(ab, cd, ab_pad, cd_pad, tk, row_pad, col_pad,
                 cd_pad // tk, vmem_limit)


def _accumulate_step(f_ref, acc_ref, fpad_ref, *, mxu_dtype, ab):
    """One k-step: acc += F_tile @ F_tile.T (MXU, f32 accumulation)."""

    @pl.when(pl.program_id(0) == 0)
    def _():
        acc_ref[...] = jnp.zeros_like(acc_ref)
        if fpad_ref is not None:
            # Rows ab..ab_pad stay zero for the whole reduction; zero once.
            fpad_ref[...] = jnp.zeros_like(fpad_ref)

    if fpad_ref is not None:
        # Row-pad (and cast) the tile inside VMEM so the dot output and the
        # accumulator/gram are lane-dense (128-multiple).  This is a cheap
        # VMEM copy hidden under the HBM DMA, never an extra HBM pass.
        fpad_ref[0:ab, :] = f_ref[...].astype(fpad_ref.dtype)
        f = fpad_ref[...]
    else:
        f = f_ref[...].astype(mxu_dtype)

    # Contract the lane (c*d) axis of f against itself: F @ F.T on the MXU
    # with no explicit transpose through the XLU; bf16 (or f32) operands,
    # f32 accumulation.
    acc_ref[...] += lax.dot_general(
        f, f,
        dimension_numbers=(((1,), (1,)), ((), ())),
        preferred_element_type=jnp.float32,
    )


def _gram_kernel(f_ref, g_ref, acc_ref, *fpad, inv_n, mxu_dtype, ab):
    """Gram-only kernel: G = (F @ F.T) * inv_n, written once at the last step."""
    _accumulate_step(f_ref, acc_ref, fpad[0] if fpad else None,
                     mxu_dtype=mxu_dtype, ab=ab)

    @pl.when(pl.program_id(0) == pl.num_programs(0) - 1)
    def _():
        g_ref[...] = acc_ref[...] * inv_n


def _style_loss_kernel(f_ref, t_ref, loss_ref, acc_ref, *fpad,
                       inv_n, inv_count, mxu_dtype, ab):
    """Loss-only kernel: mse((F @ F.T) * inv_n, target) -> scalar in SMEM."""
    _accumulate_step(f_ref, acc_ref, fpad[0] if fpad else None,
                     mxu_dtype=mxu_dtype, ab=ab)

    @pl.when(pl.program_id(0) == pl.num_programs(0) - 1)
    def _():
        # Padded rows/cols are zero in both the gram and the target, so the
        # sum of squared diffs is exact; divide by the TRUE element count.
        diff = acc_ref[...] * inv_n - t_ref[...]
        loss_ref[0] = jnp.sum(diff * diff) * inv_count


def _feature_matrix(x, plan):
    feats = x.reshape(plan.ab, plan.cd)
    if plan.col_pad:
        # Only reached when c*d is ragged AND too big for one block.
        feats = jnp.pad(feats, ((0, 0), (0, plan.cd_pad - plan.cd)))
    return feats


def _scratch_shapes(plan, mxu_dtype):
    scratch = [pltpu.VMEM((plan.ab_pad, plan.ab_pad), jnp.float32)]
    if plan.row_pad:
        scratch.append(pltpu.VMEM((plan.ab_pad, plan.tk), mxu_dtype))
    return scratch


def gram_matrix(x, *, mxu_dtype=jnp.bfloat16):
    """Pallas-backed equivalent of the PyTorch gram_matrix (NCHW input)."""
    plan = _plan(x.shape, x.dtype, mxu_dtype)
    feats = _feature_matrix(x, plan)
    inv_n = 1.0 / float(plan.ab * plan.cd)

    gram_pad = pl.pallas_call(
        functools.partial(_gram_kernel, inv_n=inv_n, mxu_dtype=mxu_dtype,
                          ab=plan.ab),
        out_shape=jax.ShapeDtypeStruct((plan.ab_pad, plan.ab_pad), jnp.float32),
        grid=(plan.num_k,),
        in_specs=[pl.BlockSpec((plan.ab, plan.tk), lambda k: (0, k))],
        out_specs=pl.BlockSpec((plan.ab_pad, plan.ab_pad), lambda k: (0, 0)),
        scratch_shapes=_scratch_shapes(plan, mxu_dtype),
        compiler_params=pltpu.CompilerParams(
            dimension_semantics=("arbitrary",),
            vmem_limit_bytes=plan.vmem_limit),
    )(feats)
    return gram_pad[:plan.ab, :plan.ab]


def style_loss_value(x, target_gram, *, mxu_dtype=jnp.bfloat16):
    """mse_loss(gram_matrix(x), target_gram) without writing the gram to HBM."""
    plan = _plan(x.shape, x.dtype, mxu_dtype)
    feats = _feature_matrix(x, plan)
    pad = plan.ab_pad - plan.ab
    tgt = jnp.pad(target_gram.astype(jnp.float32), ((0, pad), (0, pad)))
    inv_n = 1.0 / float(plan.ab * plan.cd)
    inv_count = 1.0 / float(plan.ab * plan.ab)

    loss = pl.pallas_call(
        functools.partial(_style_loss_kernel, inv_n=inv_n,
                          inv_count=inv_count, mxu_dtype=mxu_dtype,
                          ab=plan.ab),
        out_shape=jax.ShapeDtypeStruct((1,), jnp.float32),
        grid=(plan.num_k,),
        in_specs=[
            pl.BlockSpec((plan.ab, plan.tk), lambda k: (0, k)),
            # Constant index map -> fetched only once across the k loop.
            pl.BlockSpec((plan.ab_pad, plan.ab_pad), lambda k: (0, 0)),
        ],
        # Scalar loss belongs in SMEM: avoids a lane-sparse masked VMEM store.
        out_specs=pl.BlockSpec(memory_space=pltpu.MemorySpace.SMEM),
        scratch_shapes=_scratch_shapes(plan, mxu_dtype),
        compiler_params=pltpu.CompilerParams(
            dimension_semantics=("arbitrary",),
            vmem_limit_bytes=plan.vmem_limit),
    )(feats, tgt)
    return loss[0]


class StyleLoss:
    """JAX/Pallas port of the PyTorch StyleLoss module."""

    def __init__(self, target_feature, *, mxu_dtype=jnp.bfloat16):
        # One-time target gram: computed at full f32 MXU precision and held
        # as a concrete (detached) array.
        self.mxu_dtype = mxu_dtype
        self.target = gram_matrix(target_feature, mxu_dtype=jnp.float32)
        self.loss = None

    def __call__(self, x):
        # TODO(synk): stateful self.loss mirrors the PyTorch module; it is not
        # jit/grad friendly — a functional API would return (x, loss).
        self.loss = style_loss_value(x, self.target, mxu_dtype=self.mxu_dtype)
        return x  # module returns its input unchanged


if __name__ == "__main__":
    key = jax.random.PRNGKey(0)
    k_tgt, k_inp = jax.random.split(key)

    # Small shapes consistent with the module: NCHW (a=2, b=4, c=16, d=16)
    # -> feature matrix (8, 256), gram matrix (8, 8).
    target_feature = jax.random.normal(k_tgt, (2, 4, 16, 16), dtype=jnp.float32)
    x = jax.random.normal(k_inp, (2, 4, 16, 16), dtype=jnp.float32)

    # Default fast path: bf16 MXU operands, f32 accumulation.
    style = StyleLoss(target_feature)
    out = jax.block_until_ready(style(x))
    loss_fast = jax.block_until_ready(style.loss)

    # High-precision path: f32 MXU operands end-to-end.
    style_hp = StyleLoss(target_feature, mxu_dtype=jnp.float32)
    _ = style_hp(x)
    loss_hp = jax.block_until_ready(style_hp.loss)

    # Pure-JAX reference check (same semantics as the PyTorch module).
    def ref_gram(t):
        a, b, c, d = t.shape
        f = t.reshape(a * b, c * d)
        return (f @ f.T) / (a * b * c * d)

    g_ref = ref_gram(x)
    t_ref = ref_gram(target_feature)
    loss_ref = jnp.mean((g_ref - t_ref) ** 2)

    assert out.shape == x.shape and jnp.allclose(out, x)
    assert jnp.allclose(style.target, t_ref, rtol=1e-5, atol=1e-6)
    assert jnp.allclose(loss_hp, loss_ref, rtol=1e-5, atol=1e-6), (loss_hp, loss_ref)
    # bf16 MXU operands: relax tolerance (f32 accumulation keeps error small).
    assert jnp.allclose(loss_fast, loss_ref, rtol=5e-2, atol=2e-5), (loss_fast, loss_ref)

    print("KERNEL_OK")
</pallas_src>

<mosaic_0001>
module attributes {stable_mosaic.version = 11 : i64} {
  func.func @_gram_kernel(%arg0: i32, %arg1: memref<8x256xf32, #tpu.memory_space<vmem>>, %arg2: memref<128x128xf32, #tpu.memory_space<vmem>>, %arg3: memref<128x128xf32, #tpu.memory_space<vmem>>, %arg4: memref<128x256xf32, #tpu.memory_space<vmem>>) attributes {dimension_semantics = [#tpu.dimension_semantics<arbitrary>], iteration_bounds = array<i64: 1>, scalar_prefetch = 0 : i64, scratch_operands = 2 : i64, tpu.core_type = #tpu.core_type<tc>, window_params = [{transform_indices = @transform_0, window_bounds = array<i64: 8, 256>}, {pipeline_mode = #tpu.pipeline_mode<synchronous>, transform_indices = @transform_1, window_bounds = array<i64: 128, 128>}]} {
    %c0_i32 = arith.constant 0 : i32
    %0 = arith.cmpi eq, %arg0, %c0_i32 : i32
    %1 = arith.extui %0 : i1 to i32
    %c0_i32_0 = arith.constant 0 : i32
    %2 = arith.cmpi ne, %1, %c0_i32_0 : i32
    scf.if %2 {
      %cst_12 = arith.constant 0.000000e+00 : f32
      %13 = vector.broadcast %cst_12 : f32 to vector<128x128xf32>
      %c0_13 = arith.constant 0 : index
      %c0_14 = arith.constant 0 : index
      %14 = vector.load %arg3[%c0_13, %c0_14] : memref<128x128xf32, #tpu.memory_space<vmem>>, vector<128x128xf32>
      tpu.vector_store %arg3[%c0_13, %c0_14], %13 {strides = array<i32>} : memref<128x128xf32, #tpu.memory_space<vmem>>, vector<128x128xf32>,
      %cst_15 = arith.constant 0.000000e+00 : f32
      %15 = vector.broadcast %cst_15 : f32 to vector<128x256xf32>
      %c0_16 = arith.constant 0 : index
      %c0_17 = arith.constant 0 : index
      %16 = vector.load %arg4[%c0_16, %c0_17] : memref<128x256xf32, #tpu.memory_space<vmem>>, vector<128x256xf32>
      tpu.vector_store %arg4[%c0_16, %c0_17], %15 {strides = array<i32>} : memref<128x256xf32, #tpu.memory_space<vmem>>, vector<128x256xf32>,
    } else {
    }
    %c0 = arith.constant 0 : index
    %c0_1 = arith.constant 0 : index
    %3 = vector.load %arg1[%c0, %c0_1] : memref<8x256xf32, #tpu.memory_space<vmem>>, vector<8x256xf32>
    %c0_2 = arith.constant 0 : index
    %c0_3 = arith.constant 0 : index
    %4 = vector.load %arg4[%c0_2, %c0_3] : memref<128x256xf32, #tpu.memory_space<vmem>>, vector<8x256xf32>
    tpu.vector_store %arg4[%c0_2, %c0_3], %3 {strides = array<i32>} : memref<128x256xf32, #tpu.memory_space<vmem>>, vector<8x256xf32>,
    %c0_4 = arith.constant 0 : index
    %c0_5 = arith.constant 0 : index
    %5 = vector.load %arg4[%c0_4, %c0_5] : memref<128x256xf32, #tpu.memory_space<vmem>>, vector<128x256xf32>
    %c0_6 = arith.constant 0 : index
    %c0_7 = arith.constant 0 : index
    %6 = vector.load %arg3[%c0_6, %c0_7] : memref<128x128xf32, #tpu.memory_space<vmem>>, vector<128x128xf32>
    %cst = arith.constant dense<0.000000e+00> : vector<128x128xf32>
    %7 = tpu.matmul %5, %5, %cst {dimension_numbers = #tpu.dot_dimension_numbers<[1], [1], [0], [0], [0, 0, 1, 0], [], []>} : vector<128x256xf32>, vector<128x256xf32>, vector<128x128xf32> -> vector<128x128xf32>
    %8 = arith.addf %6, %7 : vector<128x128xf32>
    %c0_8 = arith.constant 0 : index
    %c0_9 = arith.constant 0 : index
    %9 = vector.load %arg3[%c0_8, %c0_9] : memref<128x128xf32, #tpu.memory_space<vmem>>, vector<128x128xf32>
    tpu.vector_store %arg3[%c0_8, %c0_9], %8 {strides = array<i32>} : memref<128x128xf32, #tpu.memory_space<vmem>>, vector<128x128xf32>,
    %c0_i32_10 = arith.constant 0 : i32
    %10 = arith.cmpi eq, %arg0, %c0_i32_10 : i32
    %11 = arith.extui %10 : i1 to i32
    %c0_i32_11 = arith.constant 0 : i32
    %12 = arith.cmpi ne, %11, %c0_i32_11 : i32
    scf.if %12 {
      %c0_12 = arith.constant 0 : index
      %c0_13 = arith.constant 0 : index
      %13 = vector.load %arg3[%c0_12, %c0_13] : memref<128x128xf32, #tpu.memory_space<vmem>>, vector<128x128xf32>
      %cst_14 = arith.constant 4.8828125E-4 : f32
      %14 = vector.broadcast %cst_14 : f32 to vector<128x128xf32>
      %15 = arith.mulf %13, %14 : vector<128x128xf32>
      %c0_15 = arith.constant 0 : index
      %c0_16 = arith.constant 0 : index
      %16 = vector.load %arg2[%c0_15, %c0_16] : memref<128x128xf32, #tpu.memory_space<vmem>>, vector<128x128xf32>
      tpu.vector_store %arg2[%c0_15, %c0_16], %15 {strides = array<i32>} : memref<128x128xf32, #tpu.memory_space<vmem>>, vector<128x128xf32>,
    } else {
    }
    return
  }
  func.func @transform_0(%arg0: i32) -> (i32, i32) {
    %c0_i32 = arith.constant 0 : i32
    %c0_i32_0 = arith.constant 0 : i32
    return %c0_i32, %arg0 : i32, i32
  }
  func.func @transform_1(%arg0: i32) -> (i32, i32) {
    %c0_i32 = arith.constant 0 : i32
    %c0_i32_0 = arith.constant 0 : i32
    %c0_i32_1 = arith.constant 0 : i32
    return %c0_i32, %c0_i32_0 : i32, i32
  }
}

</mosaic_0001>

<llo_original>
// kernel: tpu_custom_call.1
$region0: #{tpu_custom_call.1}
  #allocation0 [shape = 'u32[]', space=smem, size = 0x4, offset = 0x4, fixed_abs, tag = 'smem constant byte address 0x4 - core index']
  #allocation1 [shape = 'u32[72,128]{1,0:T(1,128)}', space=vmem, size = 0x9000, scoped, tag = 'internal scratch']
  #allocation2 [shape = 'f32[128,128]{1,0:T(8,128)}', space=vmem, size = 0x10000, scoped, tag = 'scratch operand']
  #allocation3 [shape = 'f32[128,256]{1,0:T(8,128)}', space=vmem, size = 0x20000, scoped, tag = 'scratch operand']
  %s0 = inlined_call_operand.hbm [shape: f32[8,256], index: 0, kind: input, shape index: {}]
  %s1 = inlined_call_operand.hbm [shape: f32[128,128], index: 1, kind: output, shape index: {}]
  %s2 = sld [smem:[#allocation0]]
  $region26: #{tpu_custom_call.1} parent=0
    _
  %s4 = ssub.s32 1, %s2
  %s5 = scalar_select 0, %s4, %s2
  $region1: #{tpu_custom_call.1} parent=0
    #allocation4 [shape = 'u8[8192]{0}', space=vmem, size = 0x2000, scoped, tag = 'input window, operand 0, single buffered']
    #allocation5 [shape = 's32[1]{0}', space=sflag, size = 0x4, scoped, tag = 'scoped memory for tpu_custom_call.1']
    #allocation6 [shape = 's32[1]{0}', space=sflag, size = 0x4, scoped, tag = 'scoped memory for tpu_custom_call.1']
    #allocation7 [shape = 'u8[65536]{0}', space=vmem, size = 0x10000, scoped, tag = 'output window, operand 0, single buffered']
    %6 = vsyncpa [#allocation5], 0
    %7 = vsyncpa [#allocation6], 0
    // Predicated region
    $region2: #{tpu_custom_call.1} parent=1 // pred_check
      _
    $region3: #{tpu_custom_call.1} parent=1 // pred_check_branch
      %9 = sbr.rel (0) target = $region5
    $region4: #{tpu_custom_call.1} parent=1 // pred_region
      %11 = vsyncadd [#allocation5], 0
      %s13 = sshll.u32 %s0, 4
      %s14 = int_to_ptr.hbm [resolvable:$true] %s13
      %s15 = sshll.u32 [#allocation4], 4
      %s16 = int_to_ptr.vmem [resolvable:$true] %s15
      %18 = dma.hbm_to_vmem [thread:$0]  %s14, 256, %s16, [#allocation5]
    $region5: #{tpu_custom_call.1} parent=1 // pred_fallthru
      _
    // Predicated region
    $region6: #{tpu_custom_call.1} parent=1 // pred_check
      _
    $region7: #{tpu_custom_call.1} parent=1 // pred_check_branch
      %20 = sbr.rel (0) target = $region9
    $region8: #{tpu_custom_call.1} parent=1 // pred_region
      %22 = dma.done [#allocation5], 256
    $region9: #{tpu_custom_call.1} parent=1 // pred_fallthru
      _
    %p23 = scmp.eq.s32.totalorder 0, 0
    // Predicated region
    $region10: #{tpu_custom_call.1} parent=1 // pred_check
      %p24 = pneg %p23
    $region11: #{tpu_custom_call.1} parent=1 // pred_check_branch
      %26 = sbr.rel (%p24) target = $region13
    $region12: #{tpu_custom_call.1} parent=1 // pred_region
      %27 = vst [vmem:[#allocation2] sm:$0xff] 0.0
      %28 = vst [vmem:[#allocation2 + $0x8] sm:$0xff] 0.0
      %29 = vst [vmem:[#allocation2 + $0x10] sm:$0xff] 0.0
      %30 = vst [vmem:[#allocation2 + $0x18] sm:$0xff] 0.0
      %31 = vst [vmem:[#allocation2 + $0x20] sm:$0xff] 0.0
      %32 = vst [vmem:[#allocation2 + $0x28] sm:$0xff] 0.0
      %33 = vst [vmem:[#allocation2 + $0x30] sm:$0xff] 0.0
      %34 = vst [vmem:[#allocation2 + $0x38] sm:$0xff] 0.0
      %35 = vst [vmem:[#allocation2 + $0x40] sm:$0xff] 0.0
      %36 = vst [vmem:[#allocation2 + $0x48] sm:$0xff] 0.0
      %37 = vst [vmem:[#allocation2 + $0x50] sm:$0xff] 0.0
      %38 = vst [vmem:[#allocation2 + $0x58] sm:$0xff] 0.0
      %39 = vst [vmem:[#allocation2 + $0x60] sm:$0xff] 0.0
      %40 = vst [vmem:[#allocation2 + $0x68] sm:$0xff] 0.0
      %41 = vst [vmem:[#allocation2 + $0x70] sm:$0xff] 0.0
      %42 = vst [vmem:[#allocation2 + $0x78] sm:$0xff] 0.0
      %43 = vst [vmem:[#allocation3] sm:$0xff] 0.0
      %44 = vst [vmem:[#allocation3 + $0x8] sm:$0xff] 0.0
      %45 = vst [vmem:[#allocation3 + $0x10] sm:$0xff] 0.0
      %46 = vst [vmem:[#allocation3 + $0x18] sm:$0xff] 0.0
      %47 = vst [vmem:[#allocation3 + $0x20] sm:$0xff] 0.0
      %48 = vst [vmem:[#allocation3 + $0x28] sm:$0xff] 0.0
      %49 = vst [vmem:[#allocation3 + $0x30] sm:$0xff] 0.0
      %50 = vst [vmem:[#allocation3 + $0x38] sm:$0xff] 0.0
      %51 = vst [vmem:[#allocation3 + $0x40] sm:$0xff] 0.0
      %52 = vst [vmem:[#allocation3 + $0x48] sm:$0xff] 0.0
      %53 = vst [vmem:[#allocation3 + $0x50] sm:$0xff] 0.0
      %54 = vst [vmem:[#allocation3 + $0x58] sm:$0xff] 0.0
      %55 = vst [vmem:[#allocation3 + $0x60] sm:$0xff] 0.0
      %56 = vst [vmem:[#allocation3 + $0x68] sm:$0xff] 0.0
      %57 = vst [vmem:[#allocation3 + $0x70] sm:$0xff] 0.0
      %58 = vst [vmem:[#allocation3 + $0x78] sm:$0xff] 0.0
      %59 = vst [vmem:[#allocation3 + $0x80] sm:$0xff] 0.0
      %60 = vst [vmem:[#allocation3 + $0x88] sm:$0xff] 0.0
      %61 = vst [vmem:[#allocation3 + $0x90] sm:$0xff] 0.0
      %62 = vst [vmem:[#allocation3 + $0x98] sm:$0xff] 0.0
      %63 = vst [vmem:[#allocation3 + $0xa0] sm:$0xff] 0.0
      %64 = vst [vmem:[#allocation3 + $0xa8] sm:$0xff] 0.0
      %65 = vst [vmem:[#allocation3 + $0xb0] sm:$0xff] 0.0
      %66 = vst [vmem:[#allocation3 + $0xb8] sm:$0xff] 0.0
      %67 = vst [vmem:[#allocation3 + $0xc0] sm:$0xff] 0.0
      %68 = vst [vmem:[#allocation3 + $0xc8] sm:$0xff] 0.0
      %69 = vst [vmem:[#allocation3 + $0xd0] sm:$0xff] 0.0
      %70 = vst [vmem:[#allocation3 + $0xd8] sm:$0xff] 0.0
      %71 = vst [vmem:[#allocation3 + $0xe0] sm:$0xff] 0.0
      %72 = vst [vmem:[#allocation3 + $0xe8] sm:$0xff] 0.0
      %73 = vst [vmem:[#allocation3 + $0xf0] sm:$0xff] 0.0
      %74 = vst [vmem:[#allocation3 + $0xf8] sm:$0xff] 0.0
    $region13: #{tpu_custom_call.1} parent=1 // pred_fallthru
      _
    %v75 = vld [vmem:[#allocation4] sm:$0xff]
    %v76 = vld [vmem:[#allocation4 + $0x8] sm:$0xff]
    %77 = vst [vmem:[#allocation3] sm:$0xff] %v75
    %78 = vst [vmem:[#allocation3 + $0x8] sm:$0xff] %v76
    %v79 = vld [vmem:[#allocation3] sm:$0xff]
    %v80 = vld [vmem:[#allocation3 + $0x8] sm:$0xff]
    %v81 = vld [vmem:[#allocation3 + $0x10] sm:$0xff]
    %v82 = vld [vmem:[#allocation3 + $0x18] sm:$0xff]
    %v83 = vld [vmem:[#allocation3 + $0x20] sm:$0xff]
    %v84 = vld [vmem:[#allocation3 + $0x28] sm:$0xff]
    %v85 = vld [vmem:[#allocation3 + $0x30] sm:$0xff]
    %v86 = vld [vmem:[#allocation3 + $0x38] sm:$0xff]
    %v87 = vld [vmem:[#allocation3 + $0x40] sm:$0xff]
    %v88 = vld [vmem:[#allocation3 + $0x48] sm:$0xff]
    %v89 = vld [vmem:[#allocation3 + $0x50] sm:$0xff]
    %v90 = vld [vmem:[#allocation3 + $0x58] sm:$0xff]
    %v91 = vld [vmem:[#allocation3 + $0x60] sm:$0xff]
    %v92 = vld [vmem:[#allocation3 + $0x68] sm:$0xff]
    %v93 = vld [vmem:[#allocation3 + $0x70] sm:$0xff]
    %v94 = vld [vmem:[#allocation3 + $0x78] sm:$0xff]
    %v95 = vld [vmem:[#allocation3 + $0x80] sm:$0xff]
    %v96 = vld [vmem:[#allocation3 + $0x88] sm:$0xff]
    %v97 = vld [vmem:[#allocation3 + $0x90] sm:$0xff]
    %v98 = vld [vmem:[#allocation3 + $0x98] sm:$0xff]
    %v99 = vld [vmem:[#allocation3 + $0xa0] sm:$0xff]
    %v100 = vld [vmem:[#allocation3 + $0xa8] sm:$0xff]
    %v101 = vld [vmem:[#allocation3 + $0xb0] sm:$0xff]
    %v102 = vld [vmem:[#allocation3 + $0xb8] sm:$0xff]
    %v103 = vld [vmem:[#allocation3 + $0xc0] sm:$0xff]
    %v104 = vld [vmem:[#allocation3 + $0xc8] sm:$0xff]
    %v105 = vld [vmem:[#allocation3 + $0xd0] sm:$0xff]
    %v106 = vld [vmem:[#allocation3 + $0xd8] sm:$0xff]
    %v107 = vld [vmem:[#allocation3 + $0xe0] sm:$0xff]
    %v108 = vld [vmem:[#allocation3 + $0xe8] sm:$0xff]
    %v109 = vld [vmem:[#allocation3 + $0xf0] sm:$0xff]
    %v110 = vld [vmem:[#allocation3 + $0xf8] sm:$0xff]
    %v111 = vld [vmem:[#allocation2] sm:$0xff]
    %v112 = vld [vmem:[#allocation2 + $0x8] sm:$0xff]
    %v113 = vld [vmem:[#allocation2 + $0x10] sm:$0xff]
    %v114 = vld [vmem:[#allocation2 + $0x18] sm:$0xff]
    %v115 = vld [vmem:[#allocation2 + $0x20] sm:$0xff]
    %v116 = vld [vmem:[#allocation2 + $0x28] sm:$0xff]
    %v117 = vld [vmem:[#allocation2 + $0x30] sm:$0xff]
    %v118 = vld [vmem:[#allocation2 + $0x38] sm:$0xff]
    %v119 = vld [vmem:[#allocation2 + $0x40] sm:$0xff]
    %v120 = vld [vmem:[#allocation2 + $0x48] sm:$0xff]
    %v121 = vld [vmem:[#allocation2 + $0x50] sm:$0xff]
    %v122 = vld [vmem:[#allocation2 + $0x58] sm:$0xff]
    %v123 = vld [vmem:[#allocation2 + $0x60] sm:$0xff]
    %v124 = vld [vmem:[#allocation2 + $0x68] sm:$0xff]
    %v125 = vld [vmem:[#allocation2 + $0x70] sm:$0xff]
    %v126 = vld [vmem:[#allocation2 + $0x78] sm:$0xff]
    %127 = vmatpush.xpose.msra.mxu0 %v109
    %128 = vmatpush.xpose.msra.mxu0 %v107
    %129 = vmatpush.xpose.msra.mxu0 %v105
    %130 = vmatpush.xpose.msra.mxu0 %v103
    %131 = vmatpush.xpose.msra.mxu0 %v101
    %132 = vmatpush.xpose.msra.mxu0 %v99
    %133 = vmatpush.xpose.msra.mxu0 %v97
    %134 = vmatpush.xpose.msra.mxu0 %v95
    %135 = vmatpush.xpose.msra.mxu0 %v93
    %136 = vmatpush.xpose.msra.mxu0 %v91
    %137 = vmatpush.xpose.msra.mxu0 %v89
    %138 = vmatpush.xpose.msra.mxu0 %v87
    %139 = vmatpush.xpose.msra.mxu0 %v85
    %140 = vmatpush.xpose.msra.mxu0 %v83
    %141 = vmatpush.xpose.msra.mxu0 %v81
    %142 = vmatpush.xpose.msra.mxu0 %v79
    %143 = vmatmul.f32.gmra.mxu0 %v79
    %v144 = vpop.f32.mrf.mxu0
    %v145 = vadd.f32 0.0, %v144
    %146 = vmatmul.f32.gmra.mxu0 %v81
    %v147 = vpop.f32.mrf.mxu0
    %v148 = vadd.f32 0.0, %v147
    %149 = vmatmul.f32.gmra.mxu0 %v83
    %v150 = vpop.f32.mrf.mxu0
    %v151 = vadd.f32 0.0, %v150
    %152 = vmatmul.f32.gmra.mxu0 %v85
    %v153 = vpop.f32.mrf.mxu0
    %v154 = vadd.f32 0.0, %v153
    %155 = vmatmul.f32.gmra.mxu0 %v87
    %v156 = vpop.f32.mrf.mxu0
    %v157 = vadd.f32 0.0, %v156
    %158 = vmatmul.f32.gmra.mxu0 %v89
    %v159 = vpop.f32.mrf.mxu0
    %v160 = vadd.f32 0.0, %v159
    %161 = vmatmul.f32.gmra.mxu0 %v91
    %v162 = vpop.f32.mrf.mxu0
    %v163 = vadd.f32 0.0, %v162
    %164 = vmatmul.f32.gmra.mxu0 %v93
    %v165 = vpop.f32.mrf.mxu0
    %v166 = vadd.f32 0.0, %v165
    %167 = vmatmul.f32.gmra.mxu0 %v95
    %v168 = vpop.f32.mrf.mxu0
    %v169 = vadd.f32 0.0, %v168
    %170 = vmatmul.f32.gmra.mxu0 %v97
    %v171 = vpop.f32.mrf.mxu0
    %v172 = vadd.f32 0.0, %v171
    %173 = vmatmul.f32.gmra.mxu0 %v99
    %v174 = vpop.f32.mrf.mxu0
    %v175 = vadd.f32 0.0, %v174
    %176 = vmatmul.f32.gmra.mxu0 %v101
    %v177 = vpop.f32.mrf.mxu0
    %v178 = vadd.f32 0.0, %v177
    %179 = vmatmul.f32.gmra.mxu0 %v103
    %v180 = vpop.f32.mrf.mxu0
    %v181 = vadd.f32 0.0, %v180
    %182 = vmatmul.f32.gmra.mxu0 %v105
    %v183 = vpop.f32.mrf.mxu0
    %v184 = vadd.f32 0.0, %v183
    %185 = vmatmul.f32.gmra.mxu0 %v107
    %v186 = vpop.f32.mrf.mxu0
    %v187 = vadd.f32 0.0, %v186
    %188 = vmatmul.f32.gmra.mxu0 %v109
    %v189 = vpop.f32.mrf.mxu0
    %v190 = vadd.f32 0.0, %v189
    %191 = vdwg.mxu0
    %192 = vmatpush.xpose.msra.mxu0 %v110
    %193 = vmatpush.xpose.msra.mxu0 %v108
    %194 = vmatpush.xpose.msra.mxu0 %v106
    %195 = vmatpush.xpose.msra.mxu0 %v104
    %196 = vmatpush.xpose.msra.mxu0 %v102
    %197 = vmatpush.xpose.msra.mxu0 %v100
    %198 = vmatpush.xpose.msra.mxu0 %v98
    %199 = vmatpush.xpose.msra.mxu0 %v96
    %200 = vmatpush.xpose.msra.mxu0 %v94
    %201 = vmatpush.xpose.msra.mxu0 %v92
    %202 = vmatpush.xpose.msra.mxu0 %v90
    %203 = vmatpush.xpose.msra.mxu0 %v88
    %204 = vmatpush.xpose.msra.mxu0 %v86
    %205 = vmatpush.xpose.msra.mxu0 %v84
    %206 = vmatpush.xpose.msra.mxu0 %v82
    %207 = vmatpush.xpose.msra.mxu0 %v80
    %208 = vmatmul.f32.gmra.mxu0 %v80
    %v209 = vpop.f32.mrf.mxu0
    %v210 = vadd.f32 %v145, %v209
    %211 = vmatmul.f32.gmra.mxu0 %v82
    %v212 = vpop.f32.mrf.mxu0
    %v213 = vadd.f32 %v148, %v212
    %214 = vmatmul.f32.gmra.mxu0 %v84
    %v215 = vpop.f32.mrf.mxu0
    %v216 = vadd.f32 %v151, %v215
    %217 = vmatmul.f32.gmra.mxu0 %v86
    %v218 = vpop.f32.mrf.mxu0
    %v219 = vadd.f32 %v154, %v218
    %220 = vmatmul.f32.gmra.mxu0 %v88
    %v221 = vpop.f32.mrf.mxu0
    %v222 = vadd.f32 %v157, %v221
    %223 = vmatmul.f32.gmra.mxu0 %v90
    %v224 = vpop.f32.mrf.mxu0
    %v225 = vadd.f32 %v160, %v224
    %226 = vmatmul.f32.gmra.mxu0 %v92
    %v227 = vpop.f32.mrf.mxu0
    %v228 = vadd.f32 %v163, %v227
    %229 = vmatmul.f32.gmra.mxu0 %v94
    %v230 = vpop.f32.mrf.mxu0
    %v231 = vadd.f32 %v166, %v230
    %232 = vmatmul.f32.gmra.mxu0 %v96
    %v233 = vpop.f32.mrf.mxu0
    %v234 = vadd.f32 %v169, %v233
    %235 = vmatmul.f32.gmra.mxu0 %v98
    %v236 = vpop.f32.mrf.mxu0
    %v237 = vadd.f32 %v172, %v236
    %238 = vmatmul.f32.gmra.mxu0 %v100
    %v239 = vpop.f32.mrf.mxu0
    %v240 = vadd.f32 %v175, %v239
    %241 = vmatmul.f32.gmra.mxu0 %v102
    %v242 = vpop.f32.mrf.mxu0
    %v243 = vadd.f32 %v178, %v242
    %244 = vmatmul.f32.gmra.mxu0 %v104
    %v245 = vpop.f32.mrf.mxu0
    %v246 = vadd.f32 %v181, %v245
    %247 = vmatmul.f32.gmra.mxu0 %v106
    %v248 = vpop.f32.mrf.mxu0
    %v249 = vadd.f32 %v184, %v248
    %250 = vmatmul.f32.gmra.mxu0 %v108
    %v251 = vpop.f32.mrf.mxu0
    %v252 = vadd.f32 %v187, %v251
    %253 = vmatmul.f32.gmra.mxu0 %v110
    %v254 = vpop.f32.mrf.mxu0
    %v255 = vadd.f32 %v190, %v254
    %256 = vdwg.mxu0
    %v257 = vadd.f32 %v111, %v210
    %v258 = vadd.f32 %v112, %v213
    %v259 = vadd.f32 %v113, %v216
    %v260 = vadd.f32 %v114, %v219
    %v261 = vadd.f32 %v115, %v222
    %v262 = vadd.f32 %v116, %v225
    %v263 = vadd.f32 %v117, %v228
    %v264 = vadd.f32 %v118, %v231
    %v265 = vadd.f32 %v119, %v234
    %v266 = vadd.f32 %v120, %v237
    %v267 = vadd.f32 %v121, %v240
    %v268 = vadd.f32 %v122, %v243
    %v269 = vadd.f32 %v123, %v246
    %v270 = vadd.f32 %v124, %v249
    %v271 = vadd.f32 %v125, %v252
    %v272 = vadd.f32 %v126, %v255
    %273 = vst [vmem:[#allocation2] sm:$0xff] %v257
    %274 = vst [vmem:[#allocation2 + $0x8] sm:$0xff] %v258
    %275 = vst [vmem:[#allocation2 + $0x10] sm:$0xff] %v259
    %276 = vst [vmem:[#allocation2 + $0x18] sm:$0xff] %v260
    %277 = vst [vmem:[#allocation2 + $0x20] sm:$0xff] %v261
    %278 = vst [vmem:[#allocation2 + $0x28] sm:$0xff] %v262
    %279 = vst [vmem:[#allocation2 + $0x30] sm:$0xff] %v263
    %280 = vst [vmem:[#allocation2 + $0x38] sm:$0xff] %v264
    %281 = vst [vmem:[#allocation2 + $0x40] sm:$0xff] %v265
    %282 = vst [vmem:[#allocation2 + $0x48] sm:$0xff] %v266
    %283 = vst [vmem:[#allocation2 + $0x50] sm:$0xff] %v267
    %284 = vst [vmem:[#allocation2 + $0x58] sm:$0xff] %v268
    %285 = vst [vmem:[#allocation2 + $0x60] sm:$0xff] %v269
    %286 = vst [vmem:[#allocation2 + $0x68] sm:$0xff] %v270
    %287 = vst [vmem:[#allocation2 + $0x70] sm:$0xff] %v271
    %288 = vst [vmem:[#allocation2 + $0x78] sm:$0xff] %v272
    // Predicated region
    $region14: #{tpu_custom_call.1} parent=1 // pred_check
      %p289 = pneg %p23
    $region15: #{tpu_custom_call.1} parent=1 // pred_check_branch
      %291 = sbr.rel (%p289) target = $region17
    $region16: #{tpu_custom_call.1} parent=1 // pred_region
      %v292 = vld [vmem:[#allocation2] sm:$0xff]
      %v293 = vld [vmem:[#allocation2 + $0x8] sm:$0xff]
      %v294 = vld [vmem:[#allocation2 + $0x10] sm:$0xff]
      %v295 = vld [vmem:[#allocation2 + $0x18] sm:$0xff]
      %v296 = vld [vmem:[#allocation2 + $0x20] sm:$0xff]
      %v297 = vld [vmem:[#allocation2 + $0x28] sm:$0xff]
      %v298 = vld [vmem:[#allocation2 + $0x30] sm:$0xff]
      %v299 = vld [vmem:[#allocation2 + $0x38] sm:$0xff]
      %v300 = vld [vmem:[#allocation2 + $0x40] sm:$0xff]
      %v301 = vld [vmem:[#allocation2 + $0x48] sm:$0xff]
      %v302 = vld [vmem:[#allocation2 + $0x50] sm:$0xff]
      %v303 = vld [vmem:[#allocation2 + $0x58] sm:$0xff]
      %v304 = vld [vmem:[#allocation2 + $0x60] sm:$0xff]
      %v305 = vld [vmem:[#allocation2 + $0x68] sm:$0xff]
      %v306 = vld [vmem:[#allocation2 + $0x70] sm:$0xff]
      %v307 = vld [vmem:[#allocation2 + $0x78] sm:$0xff]
      %v308 = vmul.f32 %v292, 0.00048828125
      %v309 = vmul.f32 %v293, 0.00048828125
      %v310 = vmul.f32 %v294, 0.00048828125
      %v311 = vmul.f32 %v295, 0.00048828125
      %v312 = vmul.f32 %v296, 0.00048828125
      %v313 = vmul.f32 %v297, 0.00048828125
      %v314 = vmul.f32 %v298, 0.00048828125
      %v315 = vmul.f32 %v299, 0.00048828125
      %v316 = vmul.f32 %v300, 0.00048828125
      %v317 = vmul.f32 %v301, 0.00048828125
      %v318 = vmul.f32 %v302, 0.00048828125
      %v319 = vmul.f32 %v303, 0.00048828125
      %v320 = vmul.f32 %v304, 0.00048828125
      %v321 = vmul.f32 %v305, 0.00048828125
      %v322 = vmul.f32 %v306, 0.00048828125
      %v323 = vmul.f32 %v307, 0.00048828125
      %324 = vst [vmem:[#allocation7] sm:$0xff] %v308
      %325 = vst [vmem:[#allocation7 + $0x8] sm:$0xff] %v309
      %326 = vst [vmem:[#allocation7 + $0x10] sm:$0xff] %v310
      %327 = vst [vmem:[#allocation7 + $0x18] sm:$0xff] %v311
      %328 = vst [vmem:[#allocation7 + $0x20] sm:$0xff] %v312
      %329 = vst [vmem:[#allocation7 + $0x28] sm:$0xff] %v313
      %330 = vst [vmem:[#allocation7 + $0x30] sm:$0xff] %v314
      %331 = vst [vmem:[#allocation7 + $0x38] sm:$0xff] %v315
      %332 = vst [vmem:[#allocation7 + $0x40] sm:$0xff] %v316
      %333 = vst [vmem:[#allocation7 + $0x48] sm:$0xff] %v317
      %334 = vst [vmem:[#allocation7 + $0x50] sm:$0xff] %v318
      %335 = vst [vmem:[#allocation7 + $0x58] sm:$0xff] %v319
      %336 = vst [vmem:[#allocation7 + $0x60] sm:$0xff] %v320
      %337 = vst [vmem:[#allocation7 + $0x68] sm:$0xff] %v321
      %338 = vst [vmem:[#allocation7 + $0x70] sm:$0xff] %v322
      %339 = vst [vmem:[#allocation7 + $0x78] sm:$0xff] %v323
    $region17: #{tpu_custom_call.1} parent=1 // pred_fallthru
      _
    // Predicated region
    $region18: #{tpu_custom_call.1} parent=1 // pred_check
      _
    $region19: #{tpu_custom_call.1} parent=1 // pred_check_branch
      %341 = sbr.rel (0) target = $region21
    $region20: #{tpu_custom_call.1} parent=1 // pred_region
      %343 = vsyncadd [#allocation6], 0
      %s344 = sshll.u32 [#allocation7], 4
      %s345 = int_to_ptr.vmem [resolvable:$true] %s344
      %s346 = sshll.u32 %s1, 4
      %s347 = int_to_ptr.hbm [resolvable:$true] %s346
      %352 = dma.vmem_to_hbm [thread:$0]  %s345, 2048, %s347, [#allocation6], 128, 128, 8
    $region21: #{tpu_custom_call.1} parent=1 // pred_fallthru
      _
    // Predicated region
    $region22: #{tpu_custom_call.1} parent=1 // pred_check
      _
    $region23: #{tpu_custom_call.1} parent=1 // pred_check_branch
      %354 = sbr.rel (0) target = $region25
    $region24: #{tpu_custom_call.1} parent=1 // pred_region
      %356 = dma.done [#allocation6], 2048
    $region25: #{tpu_custom_call.1} parent=1 // pred_fallthru
      _
    %357 = vsyncpa [#allocation5], 1
    %358 = vsyncpa [#allocation6], 1

</llo_original>
